<compile_context>
chip_gen: v7x
topology: tpu7x:2x2x1
jax: 0.10.0
libtpu: 0.0.40
codegen_flags: <defaults>
</compile_context>

<pallas_src>
from functools import partial

import jax
import jax.numpy as jnp
from jax.experimental import pallas as pl
from jax.experimental.pallas import tpu as pltpu

NEGATIVE_SLOPE = 0.42
CIN, COUT, K, STRIDE = 1, 5, 9, 4      # stride only affects output size if H_in > 1
FEAT = COUT * K * K                    # 405 flattened output features
FEAT_PAD = 512                         # lane-dense padding for the tiled path
BLOCK_N = 512                          # batch tile for the gridded path
PALLAS_MIN_BATCH = 1024                # below this, fused XLA beats pallas_call overhead


# ---------------------------------------------------------------------------
# Parameter packing: done ONCE at parameter-load time (hoisted out of the
# per-call jitted path per the performance review).
# ---------------------------------------------------------------------------
def pack_params(weight, bias):
    """weight: [Cin=1, Cout=5, 9, 9], bias: [5] -> packed (2, FEAT_PAD) f32.

    Row 0 = flattened weight (co, kh, kw order), row 1 = bias broadcast over
    (kh, kw). Zero-padded to FEAT_PAD lanes for the lane-dense tiled path.
    """
    w_flat = jnp.asarray(weight, jnp.float32).reshape(1, FEAT)
    b_flat = jnp.broadcast_to(
        jnp.asarray(bias, jnp.float32)[:, None, None], (COUT, K, K)
    ).reshape(1, FEAT)
    wb = jnp.concatenate([w_flat, b_flat], axis=0)             # (2, FEAT)
    return jnp.pad(wb, ((0, 0), (0, FEAT_PAD - FEAT)))          # (2, FEAT_PAD)


# ---------------------------------------------------------------------------
# Kernel body (shared by the single-block and tiled paths).
# ---------------------------------------------------------------------------
def _convt_leaky_kernel(x_ref, wb_ref, o_ref):
    # x_ref : [rows, 1]          per-batch input scalar (Cin == 1)
    # wb_ref: [2, FEAT_PAD]      row 0 = flattened weight, row 1 = flattened bias
    # o_ref : [rows, feat]       feat is FEAT (small path) or FEAT_PAD (tiled path)
    feat = o_ref.shape[-1]                      # static at trace time
    x = x_ref[...]                              # (rows, 1)
    w = wb_ref[0:1, :feat]                      # (1, feat)
    b = wb_ref[1:2, :feat]                      # (1, feat)
    v1 = x * w + b                              # VPU broadcast multiply-add; MXU untouched
    # Keep torch.where semantics exactly (including NaN propagation) rather than
    # rewriting as jnp.maximum(v1, slope*v1).
    o_ref[...] = jnp.where(v1 > 0, v1, v1 * NEGATIVE_SLOPE)


# ---------------------------------------------------------------------------
# Pallas paths.
# ---------------------------------------------------------------------------
def _pallas_whole(x_flat, wb):
    """Single whole-array block: un-padded batch, un-padded (N, FEAT) output
    (no post-kernel slice; the masked 405-lane store is negligible here)."""
    n = x_flat.shape[0]
    return pl.pallas_call(
        _convt_leaky_kernel,
        out_shape=jax.ShapeDtypeStruct((n, FEAT), jnp.float32),
        in_specs=[
            pl.BlockSpec(memory_space=pltpu.MemorySpace.VMEM),   # x, un-padded
            pl.BlockSpec(memory_space=pltpu.MemorySpace.VMEM),   # packed wb
        ],
        out_specs=pl.BlockSpec(memory_space=pltpu.MemorySpace.VMEM),
    )(x_flat, wb)


def _pallas_tiled(x_flat, wb):
    """Large-batch path: 1-D grid over batch, (BLOCK_N, FEAT_PAD) lane-dense
    output blocks, wb resident across the grid, both TCs used on v7x."""
    n = x_flat.shape[0]
    n_pad = pl.cdiv(n, BLOCK_N) * BLOCK_N
    if n_pad != n:
        x_flat = jnp.pad(x_flat, ((0, n_pad - n), (0, 0)))      # single pad op

    out_pad = pl.pallas_call(
        _convt_leaky_kernel,
        out_shape=jax.ShapeDtypeStruct((n_pad, FEAT_PAD), jnp.float32),
        grid=(n_pad // BLOCK_N,),
        in_specs=[
            pl.BlockSpec((BLOCK_N, 1), lambda i: (i, 0)),        # x batch tile
            pl.BlockSpec((2, FEAT_PAD), lambda i: (0, 0)),       # wb resident
        ],
        out_specs=pl.BlockSpec((BLOCK_N, FEAT_PAD), lambda i: (i, 0)),
        compiler_params=pltpu.CompilerParams(
            dimension_semantics=("parallel",),                   # shard across TCs on v7x
        ),
    )(x_flat, wb)
    return out_pad[:n, :FEAT]


# ---------------------------------------------------------------------------
# Public entry point (size dispatch per the performance review).
# ---------------------------------------------------------------------------
@partial(jax.jit, static_argnames=("force_pallas",))
def conv_transpose_leaky(x, wb, force_pallas=False):
    """x: [N, 1, 1, 1]; wb: packed (2, FEAT_PAD) from pack_params -> [N, 5, 9, 9]."""
    n, cin, hin, win = x.shape
    assert cin == CIN and (hin, win) == (1, 1), "specialized for Cin=1, 1x1 input"
    assert (hin - 1) * STRIDE + K == K and (win - 1) * STRIDE + K == K

    x_flat = x.reshape(n, 1).astype(jnp.float32)

    if force_pallas or n >= PALLAS_MIN_BATCH:
        if n <= BLOCK_N:
            out_flat = _pallas_whole(x_flat, wb)
        else:
            out_flat = _pallas_tiled(x_flat, wb)
    else:
        # Tiny batch: a single fused XLA elementwise kernel beats pallas_call
        # fixed overhead (dispatch + 3 DMAs) for a ~16 KiB problem.
        w = wb[0:1, :FEAT]
        b = wb[1:2, :FEAT]
        v1 = x_flat * w + b
        out_flat = jnp.where(v1 > 0, v1, v1 * NEGATIVE_SLOPE)

    return out_flat.reshape(n, COUT, K, K)


if __name__ == "__main__":
    key = jax.random.PRNGKey(0)
    kx, kw, kb, kx2 = jax.random.split(key, 4)

    # input matches the PyTorch script: x = torch.randn(4, 1, 1, 1)
    N = 4
    x = jax.random.normal(kx, (N, CIN, 1, 1), dtype=jnp.float32)

    # deterministic parameter init (ConvTranspose2d weight layout: [Cin, Cout, K, K])
    fan = CIN * K * K
    bound = 1.0 / (fan ** 0.5)
    weight = jax.random.uniform(kw, (CIN, COUT, K, K), minval=-bound, maxval=bound,
                                dtype=jnp.float32)
    bias = jax.random.uniform(kb, (COUT,), minval=-bound, maxval=bound,
                              dtype=jnp.float32)

    # Parameter packing happens once, at load time (not per call).
    wb = jax.block_until_ready(pack_params(weight, bias))

    def ref_fn(xi):
        v1 = jnp.einsum("nc,cokl->nokl", xi.reshape(-1, CIN), weight) \
             + bias[None, :, None, None]
        return jnp.where(v1 > 0, v1, v1 * NEGATIVE_SLOPE)

    # 1) Pallas single-block kernel at the module's shape (N=4).
    out = conv_transpose_leaky(x, wb, force_pallas=True)
    jax.block_until_ready(out)
    assert out.shape == (N, COUT, K, K)
    assert jnp.allclose(out, ref_fn(x), atol=1e-5, rtol=1e-5)

    # 2) Default dispatcher at N=4 (fused XLA fast path) matches too.
    out_xla = conv_transpose_leaky(x, wb)
    jax.block_until_ready(out_xla)
    assert jnp.allclose(out_xla, ref_fn(x), atol=1e-5, rtol=1e-5)

    # 3) Large-batch tiled Pallas path (grid over batch, padding + slice exercised).
    N_BIG = 1037
    x_big = jax.random.normal(kx2, (N_BIG, CIN, 1, 1), dtype=jnp.float32)
    out_big = conv_transpose_leaky(x_big, wb)
    jax.block_until_ready(out_big)
    assert out_big.shape == (N_BIG, COUT, K, K)
    assert jnp.allclose(out_big, ref_fn(x_big), atol=1e-5, rtol=1e-5)

    print("KERNEL_OK")
</pallas_src>

<mosaic_0001>
module attributes {stable_mosaic.version = 11 : i64} {
  func.func @_convt_leaky_kernel(%arg0: memref<4x1xf32, #tpu.memory_space<vmem>>, %arg1: memref<2x512xf32, #tpu.memory_space<vmem>>, %arg2: memref<4x405xf32, #tpu.memory_space<vmem>>) attributes {dimension_semantics = [], scalar_prefetch = 0 : i64, scratch_operands = 0 : i64, tpu.core_type = #tpu.core_type<tc>} {
    %c0 = arith.constant 0 : index
    %c0_0 = arith.constant 0 : index
    %0 = vector.load %arg0[%c0, %c0_0] : memref<4x1xf32, #tpu.memory_space<vmem>>, vector<4x1xf32>
    %c0_1 = arith.constant 0 : index
    %c0_2 = arith.constant 0 : index
    %1 = vector.load %arg1[%c0_1, %c0_2] : memref<2x512xf32, #tpu.memory_space<vmem>>, vector<1x405xf32>
    %c1 = arith.constant 1 : index
    %c0_3 = arith.constant 0 : index
    %2 = vector.load %arg1[%c1, %c0_3] : memref<2x512xf32, #tpu.memory_space<vmem>>, vector<1x405xf32>
    %3 = vector.broadcast %0 : vector<4x1xf32> to vector<4x405xf32>
    %4 = vector.broadcast %1 : vector<1x405xf32> to vector<4x405xf32>
    %5 = arith.mulf %3, %4 : vector<4x405xf32>
    %6 = vector.broadcast %2 : vector<1x405xf32> to vector<4x405xf32>
    %7 = arith.addf %5, %6 : vector<4x405xf32>
    %cst = arith.constant 0.000000e+00 : f32
    %8 = vector.broadcast %cst : f32 to vector<4x405xf32>
    %9 = arith.cmpf ogt, %7, %8 : vector<4x405xf32>
    %cst_4 = arith.constant 4.200000e-01 : f32
    %10 = vector.broadcast %cst_4 : f32 to vector<4x405xf32>
    %11 = arith.mulf %7, %10 : vector<4x405xf32>
    %12 = arith.select %9, %7, %11 : vector<4x405xi1>, vector<4x405xf32>
    %c0_5 = arith.constant 0 : index
    %c0_6 = arith.constant 0 : index
    %13 = vector.load %arg2[%c0_5, %c0_6] : memref<4x405xf32, #tpu.memory_space<vmem>>, vector<4x405xf32>
    tpu.vector_store %arg2[%c0_5, %c0_6], %12 {strides = array<i32>} : memref<4x405xf32, #tpu.memory_space<vmem>>, vector<4x405xf32>,
    return
  }
}

</mosaic_0001>

<llo_original>
// kernel: conv_transpose_leaky.1
$region0: #{conv_transpose_leaky.1}
  #allocation0 [shape = 'u32[]', space=smem, size = 0x4, offset = 0x4, fixed_abs, tag = 'smem constant byte address 0x4 - core index']
  #allocation1 [shape = 'u32[144,128]{1,0:T(1,128)}', space=vmem, size = 0x12000, scoped, tag = 'internal scratch']
  %s0 = inlined_call_operand.vmem [shape: f32[4,1], index: 0, kind: input, shape index: {}]
  %s1 = inlined_call_operand.vmem [shape: f32[2,512], index: 1, kind: input, shape index: {}]
  %s2 = inlined_call_operand.vmem [shape: f32[4,405], index: 2, kind: output, shape index: {}]
  %s3 = sld [smem:[#allocation0]]
  $region18: #{conv_transpose_leaky.1} parent=0
    _
  %s5 = ssub.s32 1, %s3
  %s6 = scalar_select 0, %s5, %s3
  // Predicated region
  $region2: #{conv_transpose_leaky.1} parent=0 // pred_check
    _
  $region3: #{conv_transpose_leaky.1} parent=0 // pred_check_branch
    %8 = sbr.rel (0) target = $region5
  $region4: #{conv_transpose_leaky.1} parent=0 // pred_region
    _
  $region5: #{conv_transpose_leaky.1} parent=0 // pred_fallthru
    _
  // Predicated region
  $region6: #{conv_transpose_leaky.1} parent=0 // pred_check
    _
  $region7: #{conv_transpose_leaky.1} parent=0 // pred_check_branch
    %10 = sbr.rel (0) target = $region9
  $region8: #{conv_transpose_leaky.1} parent=0 // pred_region
    _
  $region9: #{conv_transpose_leaky.1} parent=0 // pred_fallthru
    _
  %v11 = vld [vmem:[%s0] sm:$0xf]
  %v12 = vld [vmem:[%s1] ss:$2 sm:$0xf]
  %s13 = scalar_lea.vmem %s1, 1
  %v14 = vld [vmem:[%s13] ss:$2 sm:$0xf]
  %16 = vset.pattern.permute.xlu0 0
  %17 = vperm.xlu0 %16, %v11
  %v18 = vpop.permute.xlu0 %17
  %v21 = vlaneseq
  %v22 = vshrl.u32 %v21, 7
  %v23 = vsub.s32 0, %v22
  %v24 = vrot.slane %v12, %v23
  %v25 = vlaneseq
  %v26 = vshrl.u32 %v25, 7
  %v27 = vsub.s32 1, %v26
  %v28 = vrot.slane %v12, %v27
  %v29 = vlaneseq
  %v30 = vshrl.u32 %v29, 7
  %v31 = vsub.s32 2, %v30
  %v32 = vrot.slane %v12, %v31
  %v33 = vlaneseq
  %v34 = vshrl.u32 %v33, 7
  %v35 = vsub.s32 3, %v34
  %v36 = vrot.slane %v12, %v35
  %v41 = vmul.f32 %v18, %v24
  %v42 = vmul.f32 %v18, %v28
  %v43 = vmul.f32 %v18, %v32
  %v44 = vmul.f32 %v18, %v36
  %v46 = vlaneseq
  %v47 = vshrl.u32 %v46, 7
  %v48 = vsub.s32 0, %v47
  %v49 = vrot.slane %v14, %v48
  %v50 = vlaneseq
  %v51 = vshrl.u32 %v50, 7
  %v52 = vsub.s32 1, %v51
  %v53 = vrot.slane %v14, %v52
  %v54 = vlaneseq
  %v55 = vshrl.u32 %v54, 7
  %v56 = vsub.s32 2, %v55
  %v57 = vrot.slane %v14, %v56
  %v58 = vlaneseq
  %v59 = vshrl.u32 %v58, 7
  %v60 = vsub.s32 3, %v59
  %v61 = vrot.slane %v14, %v60
  %v66 = vadd.f32 %v41, %v49
  %v67 = vadd.f32 %v42, %v53
  %v68 = vadd.f32 %v43, %v57
  %v69 = vadd.f32 %v44, %v61
  %vm70 = vcmp.gt.f32.partialorder %v66, 0.0
  %vm71 = vcmp.gt.f32.partialorder %v67, 0.0
  %vm72 = vcmp.gt.f32.partialorder %v68, 0.0
  %vm73 = vcmp.gt.f32.partialorder %v69, 0.0
  %v74 = vmul.f32 %v66, 0.42
  %v75 = vmul.f32 %v67, 0.42
  %v76 = vmul.f32 %v68, 0.42
  %v77 = vmul.f32 %v69, 0.42
  %v78 = vsel %vm70, %v66, %v74
  %v79 = vsel %vm71, %v67, %v75
  %v80 = vsel %vm72, %v68, %v76
  %v81 = vsel %vm73, %v69, %v77
  %v86 = vcombine.low %v78, %v79
  %v87 = vcombine.low %v80, %v81
  %90 = vst [vmem:[%s2] sm:$0xff] %v86
  %vm91 = vcmask 1043456
  %vm92 = vcmask 171012
  %vm93 = vmor %vm92, %vm91
  %94 = vst.msk [vmem:[%s2 + $0x8] sm:$0xff] %vm93, %v87
  // Predicated region
  $region10: #{conv_transpose_leaky.1} parent=0 // pred_check
    _
  $region11: #{conv_transpose_leaky.1} parent=0 // pred_check_branch
    %96 = sbr.rel (0) target = $region13
  $region12: #{conv_transpose_leaky.1} parent=0 // pred_region
    _
  $region13: #{conv_transpose_leaky.1} parent=0 // pred_fallthru
    _
  // Predicated region
  $region14: #{conv_transpose_leaky.1} parent=0 // pred_check
    _
  $region15: #{conv_transpose_leaky.1} parent=0 // pred_check_branch
    %98 = sbr.rel (0) target = $region17
  $region16: #{conv_transpose_leaky.1} parent=0 // pred_region
    _
  $region17: #{conv_transpose_leaky.1} parent=0 // pred_fallthru
    _

</llo_original>
